<compile_context>
chip_gen: v7x
topology: tpu7x:2x2x1
jax: 0.10.0
libtpu: 0.0.40
codegen_flags: <defaults>
</compile_context>

<pallas_src>
import jax
import jax.numpy as jnp
from jax.experimental import pallas as pl
from jax.experimental.pallas import tpu as pltpu

_LANE = 128
_MAX_TILE_ROWS = 4096     # 4 MiB in + 2 MiB out per step; ~12 MiB double-buffered.
_MIN_GRID_STEPS = 4       # keep >= 4 grid steps at large B (megacore / pipelining).
_MIN_PALLAS_BATCH = 1024  # below this, a plain fused XLA op is strictly faster.


def _round_up(a, m):
    return ((a + m - 1) // m) * m


def _logreg_kernel(x_ref, p_ref, o_ref):
    # x_ref: (IN, R, 128) f32 VMEM   (batch dense on sublanes x lanes)
    # p_ref: (IN + 1,)    f32 SMEM   (w_0 .. w_{IN-1}, bias)
    # o_ref: (R, 128)     f32 VMEM
    in_features = x_ref.shape[0]
    logits = x_ref[0] * p_ref[0]
    for k in range(1, in_features):           # static trip count (IN == 2)
        logits = logits + x_ref[k] * p_ref[k]
    logits = logits + p_ref[in_features]      # bias broadcast
    # sigmoid(x) = 1 / (1 + exp(-x)); exp hits the EUP.  approx=True would put the
    # reciprocal on the EUP as well (compute is nowhere near the bottleneck).
    z = jnp.exp(-logits)
    o_ref[...] = pl.reciprocal(1.0 + z, approx=False).astype(o_ref.dtype)


def logistic_regression(x, weight, bias, *, tile_rows=None, force_pallas=False):
    """sigmoid(x @ weight.T + bias) for nn.Linear(2, 1).

    x: [B, IN], weight: [1, IN], bias: [1]  ->  [B, 1].
    """
    B, IN = x.shape
    OUT = weight.shape[0]
    assert OUT == 1, "kernel specialised for nn.Linear(in_features, 1)"

    if not force_pallas and B < _MIN_PALLAS_BATCH:
        # Tiny batch: kernel-call + 128-lane padding overhead dwarfs the work.
        return jax.nn.sigmoid(
            x.astype(jnp.float32) @ weight.astype(jnp.float32).T
            + bias.astype(jnp.float32)
        ).astype(x.dtype)

    rows = pl.cdiv(B, _LANE)                  # 128-wide rows of batch
    if tile_rows is None:
        tile_rows = min(
            _MAX_TILE_ROWS,
            max(8, _round_up(pl.cdiv(rows, _MIN_GRID_STEPS), 8)),
        )
    # Fix the block count first, then take the smallest multiple-of-8 row tile that
    # covers it, so the tail pad stays < 8 rows per block (pad only the tail, not a
    # full tile's worth).
    num_blocks = pl.cdiv(rows, max(8, _round_up(tile_rows, 8)))
    tile_rows = _round_up(pl.cdiv(rows, num_blocks), 8)
    rows_pad = num_blocks * tile_rows
    b_pad = rows_pad * _LANE

    # Batch-on-(sublanes, lanes) layout; single fused tail-only zero pad.
    x_t = x.astype(jnp.float32).T             # (IN, B)
    if b_pad != B:
        x_t = jnp.pad(x_t, ((0, 0), (0, b_pad - B)))
    x_t = x_t.reshape(IN, rows_pad, _LANE)

    # [w_0 .. w_{IN-1}, bias] — IN+1 scalars, kept in SMEM.
    params = jnp.concatenate(
        [weight.reshape(-1), bias.reshape(-1)]
    ).astype(jnp.float32)

    out = pl.pallas_call(
        _logreg_kernel,
        out_shape=jax.ShapeDtypeStruct((rows_pad, _LANE), jnp.float32),
        grid_spec=pl.GridSpec(
            grid=(num_blocks,),
            in_specs=[
                pl.BlockSpec((IN, tile_rows, _LANE), lambda i: (0, i, 0)),
                pl.BlockSpec(memory_space=pltpu.MemorySpace.SMEM),
            ],
            out_specs=pl.BlockSpec((tile_rows, _LANE), lambda i: (i, 0)),
        ),
        compiler_params=pltpu.CompilerParams(
            dimension_semantics=("parallel",),
        ),
        cost_estimate=pl.CostEstimate(
            flops=2 * IN * b_pad,
            transcendentals=b_pad,
            bytes_accessed=(IN + 1) * b_pad * 4 + (IN + 1) * 4,
        ),
    )(x_t, params)

    # (rows_pad, 128) -> (b_pad,) is a free row-major reshape; slice the pad off
    # and restore the PyTorch [B, 1] layout (no output transpose needed).
    return out.reshape(b_pad)[:B].reshape(B, OUT).astype(x.dtype)


if __name__ == "__main__":
    key = jax.random.PRNGKey(0)
    kx, kw, kb, kx2 = jax.random.split(key, 4)

    IN, OUT = 2, 1
    bound = 1.0 / jnp.sqrt(jnp.float32(IN))   # nn.Linear default init bound
    weight = jax.random.uniform(kw, (OUT, IN), jnp.float32, -bound, bound)
    bias = jax.random.uniform(kb, (OUT,), jnp.float32, -bound, bound)

    def ref(x):
        return jax.nn.sigmoid(x @ weight.T + bias)

    # Small shape consistent with the module (B=8), forced through the kernel.
    x_small = jax.random.normal(kx, (8, IN), jnp.float32)
    out_small = jax.block_until_ready(
        logistic_regression(x_small, weight, bias, force_pallas=True))
    assert out_small.shape == (8, OUT)
    assert jnp.allclose(out_small, ref(x_small), atol=1e-6, rtol=1e-6)

    # A ragged batch (not a multiple of 128) through the kernel as well.
    x_mid = jax.random.normal(kx2, (300, IN), jnp.float32)
    out_mid = jax.block_until_ready(
        logistic_regression(x_mid, weight, bias, force_pallas=True))
    assert out_mid.shape == (300, OUT)
    assert jnp.allclose(out_mid, ref(x_mid), atol=1e-6, rtol=1e-6)

    # Auto-dispatch path (tiny batch bypasses Pallas, pure XLA).
    out_auto = jax.block_until_ready(logistic_regression(x_small, weight, bias))
    assert jnp.allclose(out_auto, ref(x_small), atol=1e-6, rtol=1e-6)

    print("KERNEL_OK")
</pallas_src>

<mosaic_0001>
module attributes {stable_mosaic.version = 11 : i64} {
  func.func @_logreg_kernel(%arg0: i32, %arg1: memref<2x8x128xf32, #tpu.memory_space<vmem>>, %arg2: memref<3xf32, #tpu.memory_space<smem>>, %arg3: memref<8x128xf32, #tpu.memory_space<vmem>>) attributes {dimension_semantics = [#tpu.dimension_semantics<parallel>], iteration_bounds = array<i64: 1>, scalar_prefetch = 0 : i64, scratch_operands = 0 : i64, tpu.core_type = #tpu.core_type<tc>, window_params = [{transform_indices = @transform_0, window_bounds = array<i64: 2, 8, 128>}, {transform_indices = @transform_1, window_bounds = array<i64: 3>}, {transform_indices = @transform_2, window_bounds = array<i64: 8, 128>}]} {
    %c0 = arith.constant 0 : index
    %c0_0 = arith.constant 0 : index
    %c0_1 = arith.constant 0 : index
    %0 = vector.load %arg1[%c0, %c0_0, %c0_1] : memref<2x8x128xf32, #tpu.memory_space<vmem>>, vector<1x8x128xf32>
    %1 = vector.shape_cast %0 : vector<1x8x128xf32> to vector<8x128xf32>
    %c0_2 = arith.constant 0 : index
    %2 = memref.load %arg2[%c0_2] : memref<3xf32, #tpu.memory_space<smem>>
    %3 = vector.broadcast %2 : f32 to vector<8x128xf32>
    %4 = arith.mulf %1, %3 : vector<8x128xf32>
    %c1 = arith.constant 1 : index
    %c0_3 = arith.constant 0 : index
    %c0_4 = arith.constant 0 : index
    %5 = vector.load %arg1[%c1, %c0_3, %c0_4] : memref<2x8x128xf32, #tpu.memory_space<vmem>>, vector<1x8x128xf32>
    %6 = vector.shape_cast %5 : vector<1x8x128xf32> to vector<8x128xf32>
    %c1_5 = arith.constant 1 : index
    %7 = memref.load %arg2[%c1_5] : memref<3xf32, #tpu.memory_space<smem>>
    %8 = vector.broadcast %7 : f32 to vector<8x128xf32>
    %9 = arith.mulf %6, %8 : vector<8x128xf32>
    %10 = arith.addf %4, %9 : vector<8x128xf32>
    %c2 = arith.constant 2 : index
    %11 = memref.load %arg2[%c2] : memref<3xf32, #tpu.memory_space<smem>>
    %12 = vector.broadcast %11 : f32 to vector<8x128xf32>
    %13 = arith.addf %10, %12 : vector<8x128xf32>
    %cst = arith.constant 0.000000e+00 : f32
    %14 = vector.broadcast %cst : f32 to vector<8x128xf32>
    %15 = arith.subf %14, %13 : vector<8x128xf32>
    %16 = math.exp %15 : vector<8x128xf32>
    %cst_6 = arith.constant 1.000000e+00 : f32
    %17 = vector.broadcast %cst_6 : f32 to vector<8x128xf32>
    %18 = arith.addf %17, %16 : vector<8x128xf32>
    %19 = tpu.reciprocal %18 : vector<8x128xf32> -> vector<8x128xf32>
    %c0_7 = arith.constant 0 : index
    %c0_8 = arith.constant 0 : index
    %20 = vector.load %arg3[%c0_7, %c0_8] : memref<8x128xf32, #tpu.memory_space<vmem>>, vector<8x128xf32>
    tpu.vector_store %arg3[%c0_7, %c0_8], %19 {strides = array<i32>} : memref<8x128xf32, #tpu.memory_space<vmem>>, vector<8x128xf32>,
    return
  }
  func.func @transform_0(%arg0: i32) -> (i32, i32, i32) {
    %c0_i32 = arith.constant 0 : i32
    %c0_i32_0 = arith.constant 0 : i32
    %c0_i32_1 = arith.constant 0 : i32
    return %c0_i32, %arg0, %c0_i32_0 : i32, i32, i32
  }
  func.func @transform_1(%arg0: i32) -> i32 {
    %c0_i32 = arith.constant 0 : i32
    %c0_i32_0 = arith.constant 0 : i32
    return %c0_i32 : i32
  }
  func.func @transform_2(%arg0: i32) -> (i32, i32) {
    %c0_i32 = arith.constant 0 : i32
    %c0_i32_0 = arith.constant 0 : i32
    return %arg0, %c0_i32 : i32, i32
  }
}

</mosaic_0001>

<llo_original>
// kernel: tpu_custom_call.1
$region0: #{tpu_custom_call.1}
  #allocation0 [shape = 'u32[]', space=smem, size = 0x4, offset = 0x4, fixed_abs, tag = 'smem constant byte address 0x4 - core index']
  #allocation1 [shape = 'u32[144,128]{1,0:T(1,128)}', space=vmem, size = 0x12000, scoped, tag = 'internal scratch']
  %s0 = inlined_call_operand.hbm [shape: f32[2,8,128], index: 0, kind: input, shape index: {}]
  %s1 = inlined_call_operand.vmem [shape: f32[3], index: 1, kind: input, shape index: {}]
  %s2 = inlined_call_operand.hbm [shape: f32[8,128], index: 2, kind: output, shape index: {}]
  %s3 = sld [smem:[#allocation0]]
  $region26: #{tpu_custom_call.1} parent=0
    _
  %s5 = ssub.s32 1, %s3
  %s6 = scalar_select 0, %s5, %s3
  $region1: #{tpu_custom_call.1} parent=0
    #allocation2 [shape = 'u8[8192]{0}', space=vmem, size = 0x2000, scoped, tag = 'input window, operand 0, single buffered']
    #allocation3 [shape = 's32[1]{0}', space=sflag, size = 0x4, scoped, tag = 'scoped memory for tpu_custom_call.1']
    #allocation4 [shape = 's32[1]{0}', space=sflag, size = 0x4, scoped, tag = 'scoped memory for tpu_custom_call.1']
    #allocation5 [shape = 's32[1]{0}', space=sflag, size = 0x4, scoped, tag = 'scoped memory for tpu_custom_call.1']
    #allocation6 [shape = 'u8[512]{0}', space=smem, size = 0x200, scoped, tag = 'input window, operand 1, single buffered']
    #allocation7 [shape = 'u8[4096]{0}', space=vmem, size = 0x1000, scoped, tag = 'output window, operand 0, single buffered']
    %7 = vsyncpa [#allocation3], 0
    %8 = vsyncpa [#allocation5], 0
    %9 = vsyncpa [#allocation4], 0
    // Predicated region
    $region2: #{tpu_custom_call.1} parent=1 // pred_check
      _
    $region3: #{tpu_custom_call.1} parent=1 // pred_check_branch
      %11 = sbr.rel (0) target = $region5
    $region4: #{tpu_custom_call.1} parent=1 // pred_region
      %s13 = ssub.s32 256, 256
      %14 = vsyncadd [#allocation3], %s13
      %s15 = sshll.u32 [#allocation2], 4
      %s16 = int_to_ptr.vmem [resolvable:$true] %s15
      %21 = dma.hbm_to_vmem [thread:$0]  %s0, 256, %s16, [#allocation3], 128, 128, 8
    $region5: #{tpu_custom_call.1} parent=1 // pred_fallthru
      _
    // Predicated region
    $region6: #{tpu_custom_call.1} parent=1 // pred_check
      _
    $region7: #{tpu_custom_call.1} parent=1 // pred_check_branch
      %23 = sbr.rel (0) target = $region9
    $region8: #{tpu_custom_call.1} parent=1 // pred_region
      %s25 = ssub.s32 16, 16
      %26 = vsyncadd [#allocation5], %s25
      %s28 = sshll.u32 %s1, 4
      %s29 = int_to_ptr.vmem [resolvable:$true] %s28
      %31 = dma.vmem_to_smem %s29, 16, [#allocation6], [#allocation5]
    $region9: #{tpu_custom_call.1} parent=1 // pred_fallthru
      _
    // Predicated region
    $region10: #{tpu_custom_call.1} parent=1 // pred_check
      _
    $region11: #{tpu_custom_call.1} parent=1 // pred_check_branch
      %33 = sbr.rel (0) target = $region13
    $region12: #{tpu_custom_call.1} parent=1 // pred_region
      %34 = dma.done [#allocation3], 256
    $region13: #{tpu_custom_call.1} parent=1 // pred_fallthru
      _
    // Predicated region
    $region14: #{tpu_custom_call.1} parent=1 // pred_check
      _
    $region15: #{tpu_custom_call.1} parent=1 // pred_check_branch
      %36 = sbr.rel (0) target = $region17
    $region16: #{tpu_custom_call.1} parent=1 // pred_region
      %37 = dma.done [#allocation5], 16
    $region17: #{tpu_custom_call.1} parent=1 // pred_fallthru
      _
    %38 = sfence
    %v39 = vld [vmem:[#allocation2] sm:$0xff]
    %s40 = sld [smem:[#allocation6]]
    %v41 = vstv %s40
    %v42 = vmul.f32 %v39, %v41
    %s43 = scalar_lea.vmem [#allocation2], 8
    %v44 = vld [vmem:[%s43] sm:$0xff]
    %s45 = sld [smem:[#allocation6 + $0x1]]
    %v46 = vstv %s45
    %v47 = vmul.f32 %v44, %v46
    %v48 = vadd.f32 %v42, %v47
    %s49 = sld [smem:[#allocation6 + $0x2]]
    %v50 = vstv %s49
    %v51 = vadd.f32 %v48, %v50
    %v52 = vsub.f32 0.0, %v51
    %v53 = vmul.f32 %v52, 1.442695
    %v54 = vpow.pop %v53
    %v55 = vadd.f32 %v54, 1.0
    %v56 = vrcp.pop %v55
    %57 = vst [vmem:[#allocation7] sm:$0xff] %v56
    // Predicated region
    $region18: #{tpu_custom_call.1} parent=1 // pred_check
      _
    $region19: #{tpu_custom_call.1} parent=1 // pred_check_branch
      %59 = sbr.rel (0) target = $region21
    $region20: #{tpu_custom_call.1} parent=1 // pred_region
      %s61 = ssub.s32 128, 128
      %62 = vsyncadd [#allocation4], %s61
      %s64 = sshll.u32 [#allocation7], 4
      %s65 = int_to_ptr.vmem [resolvable:$true] %s64
      %67 = dma.vmem_to_hbm [thread:$0]  %s65, 128, %s2, [#allocation4]
    $region21: #{tpu_custom_call.1} parent=1 // pred_fallthru
      _
    // Predicated region
    $region22: #{tpu_custom_call.1} parent=1 // pred_check
      _
    $region23: #{tpu_custom_call.1} parent=1 // pred_check_branch
      %69 = sbr.rel (0) target = $region25
    $region24: #{tpu_custom_call.1} parent=1 // pred_region
      %70 = dma.done [#allocation4], 128
    $region25: #{tpu_custom_call.1} parent=1 // pred_fallthru
      _
    %71 = vsyncpa [#allocation3], 1
    %72 = vsyncpa [#allocation4], 1
    %73 = vsyncpa [#allocation5], 1

</llo_original>
